<compile_context>
chip_gen: v6e
topology: v6e:2x2x1
jax: 0.10.0
libtpu: 0.0.40
codegen_flags: <defaults>
</compile_context>

<pallas_src>
import functools
import math

import jax
import jax.numpy as jnp
from jax import lax
from jax.experimental import pallas as pl
from jax.experimental.pallas import tpu as pltpu

LOG_2 = math.log(2.0)
NEG_SLOPE = 0.01  # F.leaky_relu default


def _round_up(x, m):
    return ((x + m - 1) // m) * m


def _leaky_relu(x):
    return jnp.where(x > 0, x, NEG_SLOPE * x)


def _softplus(x):
    # numerically stable softplus, works in f32 and bf16
    return jnp.maximum(x, 0) + jnp.log1p(jnp.exp(-jnp.abs(x)))


def _block_diag(blocks):
    """Block-diagonal [sum(in_i), sum(out_i)] matrix from [in_i, out_i] blocks."""
    total_out = sum(b.shape[1] for b in blocks)
    rows, col_off = [], 0
    for b in blocks:
        left = jnp.zeros((b.shape[0], col_off), b.dtype)
        right = jnp.zeros((b.shape[0], total_out - col_off - b.shape[1]), b.dtype)
        rows.append(jnp.concatenate([left, b, right], axis=1))
        col_off += b.shape[1]
    return jnp.concatenate(rows, axis=0)


def _default_elementwise_dtype():
    """bf16 softplus on chips with bf16 VPU/EUP (v6e / v7x); f32 otherwise."""
    try:
        kind = jax.devices()[0].device_kind.lower()
    except Exception:  # pragma: no cover - conservative fallback
        return jnp.float32
    if ("v6" in kind) or ("v7" in kind) or ("trillium" in kind):
        return jnp.bfloat16
    return jnp.float32


def _vmem_limit_bytes(tile, emb=128):
    """Explicit scoped-VMEM budget sized from the real working set (+slack)."""
    in_bufs = 2 * 2 * tile * emb * 2        # two bf16 input tiles, double-buffered
    chunk = 3 * tile * tile * 4             # u + e_neg + mask temporaries
    outs = 2 * 2 * tile * 4                 # two f32 accumulator blocks
    need = in_bufs + chunk + outs
    # generous slack, but stay well under v7x's 64 MiB physical VMEM
    return int(min(48 * 1024 * 1024, max(16 * 1024 * 1024, 4 * need)))


# ---------------------------------------------------------------------------
# Kernel 1: fused embedding MLP (row-tiled, parallel across TensorCores)
# ---------------------------------------------------------------------------
def embed_kernel(x_ref, wblk_ref, bblk_ref, w1_ref, b1_ref, em1_ref, em2_ref):
    f32 = jnp.float32
    # [action|s_z|next_s_z] @ blockdiag(w1a, w1z, w2): one MXU matmul for all
    # three first-stage linears; both output slabs are 128-lane aligned.
    h = _leaky_relu(
        jnp.dot(x_ref[...], wblk_ref[...], preferred_element_type=f32)
        + bblk_ref[...])                                   # [TM, 256] f32
    em2_ref[...] = h[:, 128:].astype(em2_ref.dtype)        # em_2 slab
    em_cat = h[:, :128].astype(w1_ref.dtype)               # [em_1_a | em_1_z]
    em1 = _leaky_relu(
        jnp.dot(em_cat, w1_ref[...], preferred_element_type=f32)
        + b1_ref[...])                                     # [TM, 128] f32
    em1_ref[...] = em1.astype(em1_ref.dtype)


# ---------------------------------------------------------------------------
# Kernel 2: tiled fenchel-dual (JSD) loss over the N x N score matrix
# ---------------------------------------------------------------------------
def score_kernel(em2_ref, em1_ref, loss_ref, mi_ref, *,
                 tile_m, tile_c, n_valid, ew_dtype):
    f32 = jnp.float32
    i = pl.program_id(0)
    j = pl.program_id(1)
    nj = pl.num_programs(1)

    @pl.when(j == 0)
    def _init():
        loss_ref[...] = jnp.zeros_like(loss_ref)
        mi_ref[...] = jnp.zeros_like(mi_ref)

    # u_chunk = em_2[row tile] @ em_1[col chunk].T   (MXU, f32 accumulation)
    u = lax.dot_general(em2_ref[...], em1_ref[...],
                        dimension_numbers=(((1,), (1,)), ((), ())),
                        preferred_element_type=f32)        # [tile_m, tile_c]

    # JSD negative expectation: softplus(-u) + u - log2 == softplus(u) - log2
    e_neg = _softplus(u.astype(ew_dtype)) - jnp.asarray(LOG_2, ew_dtype)

    row_lo = i * tile_m
    col_lo = j * tile_c
    has_diag = jnp.logical_and(row_lo < col_lo + tile_c, col_lo < row_lo + tile_m)
    has_pad = (col_lo + tile_c) > n_valid
    needs_mask = jnp.logical_or(has_diag, has_pad)

    @pl.when(jnp.logical_not(needs_mask))
    def _fast():
        # common case: off-diagonal, fully valid block — no masks at all
        loss_ref[...] += jnp.sum(e_neg, axis=1, keepdims=True, dtype=f32)

    @pl.when(needs_mask)
    def _masked():
        row_g = row_lo + lax.broadcasted_iota(jnp.int32, (tile_m, tile_c), 0)
        col_g = col_lo + lax.broadcasted_iota(jnp.int32, (tile_m, tile_c), 1)
        diag = row_g == col_g
        keep = jnp.logical_and(col_g < n_valid, jnp.logical_not(diag))
        loss_ref[...] += jnp.sum(
            jnp.where(keep, e_neg, jnp.asarray(0.0, e_neg.dtype)),
            axis=1, keepdims=True, dtype=f32)
        # MI (positive expectation on the diagonal) — same MXU u values, f32 path.
        u_d = jnp.sum(jnp.where(diag, u, 0.0), axis=1, keepdims=True)   # [tile_m, 1]
        row_idx = row_lo + lax.broadcasted_iota(jnp.int32, (tile_m, 1), 0)
        row_has_d = jnp.logical_and(row_idx >= col_lo, row_idx < col_lo + tile_c)
        mi_ref[...] += jnp.where(row_has_d, LOG_2 - _softplus(-u_d), 0.0)

    @pl.when(j == nj - 1)
    def _finalize():
        inv_den = 1.0 / float(max(n_valid - 1, 1))        # guard N == 1
        loss_ref[...] = loss_ref[...] * inv_den - mi_ref[...]


# ---------------------------------------------------------------------------
# Wrapper
# ---------------------------------------------------------------------------
def prepare_mine_params(params, mm_dtype=jnp.bfloat16):
    """Hoist the block-diagonal weight fusion out of the per-call path."""
    f32 = jnp.float32
    return {
        "wblk": _block_diag([params["w1a"], params["w1z"], params["w2"]]
                            ).astype(mm_dtype),                    # [A+2Z, 256]
        "bblk": jnp.concatenate([params["b1a"], params["b1z"], params["b2"]],
                                axis=1).astype(f32),               # [1, 256]
        "w1": params["w1"].astype(mm_dtype),                       # [128, 128]
        "b1": params["b1"].astype(f32),                            # [1, 128]
    }


def mine_forward(action, s_z, next_s_z, prepared, *, ew_dtype=None, tile=None):
    """Returns (loss, MI), each of shape [N], matching MINE.forward semantics."""
    f32 = jnp.float32
    n = action.shape[0]
    if ew_dtype is None:
        ew_dtype = _default_elementwise_dtype()
    mm_dtype = prepared["wblk"].dtype

    x_all = jnp.concatenate([action, s_z, next_s_z], axis=1).astype(mm_dtype)
    din = x_all.shape[1]

    if tile is None:
        tile = min(256, _round_up(n, 8))
    n_pad = _round_up(n, tile)
    if n_pad != n:
        x_all = jnp.pad(x_all, ((0, n_pad - n), (0, 0)))
    num_tiles = n_pad // tile
    vmem_limit = _vmem_limit_bytes(tile)

    # --- kernel 1: embeddings (em_1, em_2), row-tiled ---
    em1, em2 = pl.pallas_call(
        embed_kernel,
        grid=(num_tiles,),
        in_specs=[
            pl.BlockSpec((tile, din), lambda i: (i, 0)),
            pl.BlockSpec((din, 256), lambda i: (0, 0)),
            pl.BlockSpec((1, 256), lambda i: (0, 0)),
            pl.BlockSpec((128, 128), lambda i: (0, 0)),
            pl.BlockSpec((1, 128), lambda i: (0, 0)),
        ],
        out_specs=(
            pl.BlockSpec((tile, 128), lambda i: (i, 0)),
            pl.BlockSpec((tile, 128), lambda i: (i, 0)),
        ),
        out_shape=(
            jax.ShapeDtypeStruct((n_pad, 128), mm_dtype),
            jax.ShapeDtypeStruct((n_pad, 128), mm_dtype),
        ),
        compiler_params=pltpu.CompilerParams(
            dimension_semantics=("parallel",),
            vmem_limit_bytes=vmem_limit),
    )(x_all, prepared["wblk"], prepared["bblk"], prepared["w1"], prepared["b1"])

    # --- kernel 2: tiled JSD fenchel-dual loss; never holds an [N, N] array ---
    loss_col, mi_col = pl.pallas_call(
        functools.partial(score_kernel, tile_m=tile, tile_c=tile,
                          n_valid=n, ew_dtype=ew_dtype),
        grid=(num_tiles, num_tiles),
        in_specs=[
            pl.BlockSpec((tile, 128), lambda i, j: (i, 0)),   # em_2 row tile
            pl.BlockSpec((tile, 128), lambda i, j: (j, 0)),   # em_1 col chunk
        ],
        out_specs=(
            pl.BlockSpec((tile, 1), lambda i, j: (i, 0)),     # loss (resident over j)
            pl.BlockSpec((tile, 1), lambda i, j: (i, 0)),     # MI   (resident over j)
        ),
        out_shape=(
            jax.ShapeDtypeStruct((n_pad, 1), f32),
            jax.ShapeDtypeStruct((n_pad, 1), f32),
        ),
        compiler_params=pltpu.CompilerParams(
            dimension_semantics=("parallel", "arbitrary"),
            vmem_limit_bytes=vmem_limit),
    )(em2, em1)

    return loss_col[:n, 0], mi_col[:n, 0]


# ---------------------------------------------------------------------------
# Init + pure-JAX reference (mask-based, mirrors the PyTorch module)
# ---------------------------------------------------------------------------
def init_params(key, action_dim, z_dim):
    """nn.Linear-style U(-1/sqrt(fan_in), 1/sqrt(fan_in)); weights [in, out]."""
    def linear(k, fan_in, fan_out):
        k_w, k_b = jax.random.split(k)
        bound = 1.0 / math.sqrt(fan_in)
        w = jax.random.uniform(k_w, (fan_in, fan_out), jnp.float32, -bound, bound)
        b = jax.random.uniform(k_b, (1, fan_out), jnp.float32, -bound, bound)
        return w, b

    k1, k2, k3, k4 = jax.random.split(key, 4)
    w1a, b1a = linear(k1, action_dim, 64)
    w1z, b1z = linear(k2, z_dim, 64)
    w1, b1 = linear(k3, 128, 128)
    w2, b2 = linear(k4, z_dim, 128)
    return {"w1a": w1a, "b1a": b1a, "w1z": w1z, "b1z": b1z,
            "w1": w1, "b1": b1, "w2": w2, "b2": b2}


def mine_reference(action, s_z, next_s_z, params, mm_dtype=jnp.bfloat16):
    """Pure-JAX reference of the PyTorch forward (mask-based formulation) with
    the same matmul dtype policy as the kernel."""
    f32 = jnp.float32

    def lin(x, w, b):
        return jnp.dot(x.astype(mm_dtype), w.astype(mm_dtype),
                       preferred_element_type=f32) + b

    lrelu = lambda x: jnp.where(x > 0, x, NEG_SLOPE * x)
    em_1_a = lrelu(lin(action, params["w1a"], params["b1a"]))
    em_1_z = lrelu(lin(s_z, params["w1z"], params["b1z"]))
    em_2 = lrelu(lin(next_s_z, params["w2"], params["b2"]))
    em_1 = lrelu(lin(jnp.concatenate([em_1_a, em_1_z], -1),
                     params["w1"], params["b1"]))

    u = jnp.dot(em_2.astype(mm_dtype), em_1.astype(mm_dtype).T,
                preferred_element_type=f32)
    n = u.shape[0]
    sp = jnp.maximum(-u, 0.0) + jnp.log1p(jnp.exp(-jnp.abs(u)))   # softplus(-u)
    e_pos = LOG_2 - sp
    e_neg = sp + u - LOG_2
    mask = jnp.eye(n, dtype=f32)
    mi = jnp.sum(e_pos * mask, axis=1)
    e_neg_term = jnp.sum(e_neg * (1.0 - mask), axis=1) / float(max(n - 1, 1))
    return e_neg_term - mi, mi


if __name__ == "__main__":
    N, ACTION_DIM, Z_DIM = 8, 16, 32

    key = jax.random.PRNGKey(0)
    k_p, k_a, k_s, k_n = jax.random.split(key, 4)

    params = init_params(k_p, ACTION_DIM, Z_DIM)
    action = jax.random.normal(k_a, (N, ACTION_DIM), jnp.float32)
    s_z = jax.random.normal(k_s, (N, Z_DIM), jnp.float32)
    next_s_z = jax.random.normal(k_n, (N, Z_DIM), jnp.float32)

    prepared = prepare_mine_params(params)
    loss_ref, mi_ref = mine_reference(action, s_z, next_s_z, params)

    # f32 elementwise path: tight check against the mask-based reference.
    loss, mi = jax.jit(functools.partial(mine_forward, ew_dtype=jnp.float32))(
        action, s_z, next_s_z, prepared)
    jax.block_until_ready((loss, mi))
    assert jnp.allclose(loss, loss_ref, atol=1e-3, rtol=1e-3), (loss, loss_ref)
    assert jnp.allclose(mi, mi_ref, atol=1e-3, rtol=1e-3), (mi, mi_ref)

    # Default chip-dependent elementwise dtype (bf16 on v6e/v7x) — looser check.
    loss2, mi2 = jax.jit(mine_forward)(action, s_z, next_s_z, prepared)
    jax.block_until_ready((loss2, mi2))
    tol = 5e-2 if _default_elementwise_dtype() == jnp.bfloat16 else 1e-3
    assert jnp.allclose(loss2, loss_ref, atol=tol, rtol=tol), (loss2, loss_ref)
    assert jnp.allclose(mi2, mi_ref, atol=tol, rtol=tol), (mi2, mi_ref)

    print("KERNEL_OK")
</pallas_src>

<mosaic_0001>
module attributes {stable_mosaic.version = 11 : i64} {
  func.func @embed_kernel(%arg0: i32, %arg1: memref<8x80xbf16, #tpu.memory_space<vmem>>, %arg2: memref<80x256xbf16, #tpu.memory_space<vmem>>, %arg3: memref<1x256xf32, #tpu.memory_space<vmem>>, %arg4: memref<128x128xbf16, #tpu.memory_space<vmem>>, %arg5: memref<1x128xf32, #tpu.memory_space<vmem>>, %arg6: memref<8x128xbf16, #tpu.memory_space<vmem>>, %arg7: memref<8x128xbf16, #tpu.memory_space<vmem>>) attributes {dimension_semantics = [#tpu.dimension_semantics<parallel>], iteration_bounds = array<i64: 1>, scalar_prefetch = 0 : i64, scratch_operands = 0 : i64, tpu.core_type = #tpu.core_type<tc>, window_params = [{transform_indices = @transform_0, window_bounds = array<i64: 8, 80>}, {pipeline_mode = #tpu.pipeline_mode<synchronous>, transform_indices = @transform_1, window_bounds = array<i64: 80, 256>}, {pipeline_mode = #tpu.pipeline_mode<synchronous>, transform_indices = @transform_2, window_bounds = array<i64: 1, 256>}, {pipeline_mode = #tpu.pipeline_mode<synchronous>, transform_indices = @transform_3, window_bounds = array<i64: 128, 128>}, {pipeline_mode = #tpu.pipeline_mode<synchronous>, transform_indices = @transform_4, window_bounds = array<i64: 1, 128>}, {transform_indices = @transform_5, window_bounds = array<i64: 8, 128>}, {transform_indices = @transform_6, window_bounds = array<i64: 8, 128>}]} {
    %c0 = arith.constant 0 : index
    %c0_0 = arith.constant 0 : index
    %0 = vector.load %arg1[%c0, %c0_0] : memref<8x80xbf16, #tpu.memory_space<vmem>>, vector<8x80xbf16>
    %c0_1 = arith.constant 0 : index
    %c0_2 = arith.constant 0 : index
    %1 = vector.load %arg2[%c0_1, %c0_2] : memref<80x256xbf16, #tpu.memory_space<vmem>>, vector<80x256xbf16>
    %cst = arith.constant dense<0.000000e+00> : vector<8x256xf32>
    %2 = tpu.matmul %0, %1, %cst {dimension_numbers = #tpu.dot_dimension_numbers<[1], [0], [0], [1], [0, 0, 1, 1], [], []>} : vector<8x80xbf16>, vector<80x256xbf16>, vector<8x256xf32> -> vector<8x256xf32>
    %c0_3 = arith.constant 0 : index
    %c0_4 = arith.constant 0 : index
    %3 = vector.load %arg3[%c0_3, %c0_4] : memref<1x256xf32, #tpu.memory_space<vmem>>, vector<1x256xf32>
    %4 = vector.broadcast %3 : vector<1x256xf32> to vector<8x256xf32>
    %5 = arith.addf %2, %4 : vector<8x256xf32>
    %cst_5 = arith.constant 0.000000e+00 : f32
    %6 = vector.broadcast %cst_5 : f32 to vector<8x256xf32>
    %7 = arith.cmpf ogt, %5, %6 : vector<8x256xf32>
    %cst_6 = arith.constant 0.00999999977 : f32
    %8 = vector.broadcast %cst_6 : f32 to vector<8x256xf32>
    %9 = arith.mulf %8, %5 : vector<8x256xf32>
    %10 = arith.select %7, %5, %9 : vector<8x256xi1>, vector<8x256xf32>
    %11 = vector.extract_strided_slice %10 {offsets = [0, 128], sizes = [8, 128], strides = [1, 1]} : vector<8x256xf32> to vector<8x128xf32>
    %12 = arith.truncf %11 : vector<8x128xf32> to vector<8x128xbf16>
    %c0_7 = arith.constant 0 : index
    %c0_8 = arith.constant 0 : index
    %13 = vector.load %arg7[%c0_7, %c0_8] : memref<8x128xbf16, #tpu.memory_space<vmem>>, vector<8x128xbf16>
    tpu.vector_store %arg7[%c0_7, %c0_8], %12 {strides = array<i32>} : memref<8x128xbf16, #tpu.memory_space<vmem>>, vector<8x128xbf16>,
    %14 = vector.extract_strided_slice %10 {offsets = [0, 0], sizes = [8, 128], strides = [1, 1]} : vector<8x256xf32> to vector<8x128xf32>
    %15 = arith.truncf %14 : vector<8x128xf32> to vector<8x128xbf16>
    %c0_9 = arith.constant 0 : index
    %c0_10 = arith.constant 0 : index
    %16 = vector.load %arg4[%c0_9, %c0_10] : memref<128x128xbf16, #tpu.memory_space<vmem>>, vector<128x128xbf16>
    %cst_11 = arith.constant dense<0.000000e+00> : vector<8x128xf32>
    %17 = tpu.matmul %15, %16, %cst_11 {dimension_numbers = #tpu.dot_dimension_numbers<[1], [0], [0], [1], [0, 0, 1, 1], [], []>} : vector<8x128xbf16>, vector<128x128xbf16>, vector<8x128xf32> -> vector<8x128xf32>
    %c0_12 = arith.constant 0 : index
    %c0_13 = arith.constant 0 : index
    %18 = vector.load %arg5[%c0_12, %c0_13] : memref<1x128xf32, #tpu.memory_space<vmem>>, vector<1x128xf32>
    %19 = vector.broadcast %18 : vector<1x128xf32> to vector<8x128xf32>
    %20 = arith.addf %17, %19 : vector<8x128xf32>
    %cst_14 = arith.constant 0.000000e+00 : f32
    %21 = vector.broadcast %cst_14 : f32 to vector<8x128xf32>
    %22 = arith.cmpf ogt, %20, %21 : vector<8x128xf32>
    %cst_15 = arith.constant 0.00999999977 : f32
    %23 = vector.broadcast %cst_15 : f32 to vector<8x128xf32>
    %24 = arith.mulf %23, %20 : vector<8x128xf32>
    %25 = arith.select %22, %20, %24 : vector<8x128xi1>, vector<8x128xf32>
    %26 = arith.truncf %25 : vector<8x128xf32> to vector<8x128xbf16>
    %c0_16 = arith.constant 0 : index
    %c0_17 = arith.constant 0 : index
    %27 = vector.load %arg6[%c0_16, %c0_17] : memref<8x128xbf16, #tpu.memory_space<vmem>>, vector<8x128xbf16>
    tpu.vector_store %arg6[%c0_16, %c0_17], %26 {strides = array<i32>} : memref<8x128xbf16, #tpu.memory_space<vmem>>, vector<8x128xbf16>,
    return
  }
  func.func @transform_0(%arg0: i32) -> (i32, i32) {
    %c0_i32 = arith.constant 0 : i32
    %c0_i32_0 = arith.constant 0 : i32
    return %arg0, %c0_i32 : i32, i32
  }
  func.func @transform_1(%arg0: i32) -> (i32, i32) {
    %c0_i32 = arith.constant 0 : i32
    %c0_i32_0 = arith.constant 0 : i32
    %c0_i32_1 = arith.constant 0 : i32
    return %c0_i32, %c0_i32_0 : i32, i32
  }
  func.func @transform_2(%arg0: i32) -> (i32, i32) {
    %c0_i32 = arith.constant 0 : i32
    %c0_i32_0 = arith.constant 0 : i32
    %c0_i32_1 = arith.constant 0 : i32
    return %c0_i32, %c0_i32_0 : i32, i32
  }
  func.func @transform_3(%arg0: i32) -> (i32, i32) {
    %c0_i32 = arith.constant 0 : i32
    %c0_i32_0 = arith.constant 0 : i32
    %c0_i32_1 = arith.constant 0 : i32
    return %c0_i32, %c0_i32_0 : i32, i32
  }
  func.func @transform_4(%arg0: i32) -> (i32, i32) {
    %c0_i32 = arith.constant 0 : i32
    %c0_i32_0 = arith.constant 0 : i32
    %c0_i32_1 = arith.constant 0 : i32
    return %c0_i32, %c0_i32_0 : i32, i32
  }
  func.func @transform_5(%arg0: i32) -> (i32, i32) {
    %c0_i32 = arith.constant 0 : i32
    %c0_i32_0 = arith.constant 0 : i32
    return %arg0, %c0_i32 : i32, i32
  }
  func.func @transform_6(%arg0: i32) -> (i32, i32) {
    %c0_i32 = arith.constant 0 : i32
    %c0_i32_0 = arith.constant 0 : i32
    return %arg0, %c0_i32 : i32, i32
  }
}

module attributes {stable_mosaic.version = 11 : i64} {
  func.func @score_kernel(%arg0: i32, %arg1: i32, %arg2: memref<8x128xbf16, #tpu.memory_space<vmem>>, %arg3: memref<8x128xbf16, #tpu.memory_space<vmem>>, %arg4: memref<8x1xf32, #tpu.memory_space<vmem>>, %arg5: memref<8x1xf32, #tpu.memory_space<vmem>>) attributes {dimension_semantics = [#tpu.dimension_semantics<parallel>, #tpu.dimension_semantics<arbitrary>], iteration_bounds = array<i64: 1, 1>, scalar_prefetch = 0 : i64, scratch_operands = 0 : i64, tpu.core_type = #tpu.core_type<tc>, window_params = [{transform_indices = @transform_0, window_bounds = array<i64: 8, 128>}, {transform_indices = @transform_1, window_bounds = array<i64: 8, 128>}, {transform_indices = @transform_2, window_bounds = array<i64: 8, 1>}, {transform_indices = @transform_3, window_bounds = array<i64: 8, 1>}]} {
    %c0_i32 = arith.constant 0 : i32
    %0 = arith.cmpi eq, %arg1, %c0_i32 : i32
    %1 = arith.extui %0 : i1 to i32
    %c0_i32_0 = arith.constant 0 : i32
    %2 = arith.cmpi ne, %1, %c0_i32_0 : i32
    scf.if %2 {
      %cst_16 = arith.constant 0.000000e+00 : f32
      %34 = vector.broadcast %cst_16 : f32 to vector<8x1xf32>
      %c0_17 = arith.constant 0 : index
      %c0_18 = arith.constant 0 : index
      %35 = vector.load %arg4[%c0_17, %c0_18] : memref<8x1xf32, #tpu.memory_space<vmem>>, vector<8x1xf32>
      tpu.vector_store %arg4[%c0_17, %c0_18], %34 {strides = array<i32>} : memref<8x1xf32, #tpu.memory_space<vmem>>, vector<8x1xf32>,
      %cst_19 = arith.constant 0.000000e+00 : f32
      %36 = vector.broadcast %cst_19 : f32 to vector<8x1xf32>
      %c0_20 = arith.constant 0 : index
      %c0_21 = arith.constant 0 : index
      %37 = vector.load %arg5[%c0_20, %c0_21] : memref<8x1xf32, #tpu.memory_space<vmem>>, vector<8x1xf32>
      tpu.vector_store %arg5[%c0_20, %c0_21], %36 {strides = array<i32>} : memref<8x1xf32, #tpu.memory_space<vmem>>, vector<8x1xf32>,
    } else {
    }
    %c0 = arith.constant 0 : index
    %c0_1 = arith.constant 0 : index
    %3 = vector.load %arg2[%c0, %c0_1] : memref<8x128xbf16, #tpu.memory_space<vmem>>, vector<8x128xbf16>
    %c0_2 = arith.constant 0 : index
    %c0_3 = arith.constant 0 : index
    %4 = vector.load %arg3[%c0_2, %c0_3] : memref<8x128xbf16, #tpu.memory_space<vmem>>, vector<8x128xbf16>
    %cst = arith.constant dense<0.000000e+00> : vector<8x8xf32>
    %5 = tpu.matmul %3, %4, %cst {dimension_numbers = #tpu.dot_dimension_numbers<[1], [1], [0], [0], [0, 0, 1, 0], [], []>} : vector<8x128xbf16>, vector<8x128xbf16>, vector<8x8xf32> -> vector<8x8xf32>
    %cst_4 = arith.constant 0.000000e+00 : f32
    %6 = vector.broadcast %cst_4 : f32 to vector<8x8xf32>
    %7 = arith.maximumf %5, %6 : vector<8x8xf32>
    %8 = math.absf %5 : vector<8x8xf32>
    %cst_5 = arith.constant 0.000000e+00 : f32
    %9 = vector.broadcast %cst_5 : f32 to vector<8x8xf32>
    %10 = arith.subf %9, %8 : vector<8x8xf32>
    %11 = math.exp %10 : vector<8x8xf32>
    %12 = math.log1p %11 : vector<8x8xf32>
    %13 = arith.addf %7, %12 : vector<8x8xf32>
    %cst_6 = arith.constant 0.693147182 : f32
    %14 = vector.broadcast %cst_6 : f32 to vector<8x8xf32>
    %15 = arith.subf %13, %14 : vector<8x8xf32>
    %c8_i32 = arith.constant 8 : i32
    %16 = arith.muli %arg0, %c8_i32 : i32
    %c8_i32_7 = arith.constant 8 : i32
    %17 = arith.muli %arg1, %c8_i32_7 : i32
    %c8_i32_8 = arith.constant 8 : i32
    %18 = arith.addi %17, %c8_i32_8 : i32
    %19 = arith.cmpi slt, %16, %18 : i32
    %c8_i32_9 = arith.constant 8 : i32
    %20 = arith.addi %16, %c8_i32_9 : i32
    %21 = arith.cmpi slt, %17, %20 : i32
    %22 = arith.andi %19, %21 : i1
    %c8_i32_10 = arith.constant 8 : i32
    %23 = arith.addi %17, %c8_i32_10 : i32
    %c8_i32_11 = arith.constant 8 : i32
    %24 = arith.cmpi sgt, %23, %c8_i32_11 : i32
    %25 = arith.ori %22, %24 : i1
    %true = arith.constant true
    %26 = arith.xori %25, %true : i1
    %27 = arith.extui %26 : i1 to i32
    %c0_i32_12 = arith.constant 0 : i32
    %28 = arith.cmpi ne, %27, %c0_i32_12 : i32
    scf.if %28 {
      %c0_16 = arith.constant 0 : index
      %c0_17 = arith.constant 0 : index
      %34 = vector.load %arg4[%c0_16, %c0_17] : memref<8x1xf32, #tpu.memory_space<vmem>>, vector<8x1xf32>
      %cst_18 = arith.constant dense<0.000000e+00> : vector<8xf32>
      %35 = vector.multi_reduction <add>, %15, %cst_18 [1] : vector<8x8xf32> to vector<8xf32>
      %36 = vector.shape_cast %35 : vector<8xf32> to vector<8x1xf32>
      %37 = arith.addf %34, %36 : vector<8x1xf32>
      %c0_19 = arith.constant 0 : index
      %c0_20 = arith.constant 0 : index
      %38 = vector.load %arg4[%c0_19, %c0_20] : memref<8x1xf32, #tpu.memory_space<vmem>>, vector<8x1xf32>
      tpu.vector_store %arg4[%c0_19, %c0_20], %37 {strides = array<i32>} : memref<8x1xf32, #tpu.memory_space<vmem>>, vector<8x1xf32>,
    } else {
    }
    %29 = arith.extui %25 : i1 to i32
    %c0_i32_13 = arith.constant 0 : i32
    %30 = arith.cmpi ne, %29, %c0_i32_13 : i32
    scf.if %30 {
      %34 = tpu.iota {dimensions = array<i32: 0>} : vector<8x8xi32>
      %35 = vector.broadcast %16 : i32 to vector<8x8xi32>
      %36 = arith.addi %35, %34 : vector<8x8xi32>
      %37 = tpu.iota {dimensions = array<i32: 1>} : vector<8x8xi32>
      %38 = vector.broadcast %17 : i32 to vector<8x8xi32>
      %39 = arith.addi %38, %37 : vector<8x8xi32>
      %40 = arith.cmpi eq, %36, %39 : vector<8x8xi32>
      %c8_i32_16 = arith.constant 8 : i32
      %41 = vector.broadcast %c8_i32_16 : i32 to vector<8x8xi32>
      %42 = arith.cmpi slt, %39, %41 : vector<8x8xi32>
      %cst_17 = arith.constant dense<true> : vector<8x8xi1>
      %43 = arith.xori %40, %cst_17 : vector<8x8xi1>
      %44 = arith.andi %42, %43 : vector<8x8xi1>
      %c0_18 = arith.constant 0 : index
      %c0_19 = arith.constant 0 : index
      %45 = vector.load %arg4[%c0_18, %c0_19] : memref<8x1xf32, #tpu.memory_space<vmem>>, vector<8x1xf32>
      %cst_20 = arith.constant 0.000000e+00 : f32
      %46 = vector.broadcast %cst_20 : f32 to vector<8x8xf32>
      %47 = arith.select %44, %15, %46 : vector<8x8xi1>, vector<8x8xf32>
      %cst_21 = arith.constant dense<0.000000e+00> : vector<8xf32>
      %48 = vector.multi_reduction <add>, %47, %cst_21 [1] : vector<8x8xf32> to vector<8xf32>
      %49 = vector.shape_cast %48 : vector<8xf32> to vector<8x1xf32>
      %50 = arith.addf %45, %49 : vector<8x1xf32>
      %c0_22 = arith.constant 0 : index
      %c0_23 = arith.constant 0 : index
      %51 = vector.load %arg4[%c0_22, %c0_23] : memref<8x1xf32, #tpu.memory_space<vmem>>, vector<8x1xf32>
      tpu.vector_store %arg4[%c0_22, %c0_23], %50 {strides = array<i32>} : memref<8x1xf32, #tpu.memory_space<vmem>>, vector<8x1xf32>,
      %cst_24 = arith.constant 0.000000e+00 : f32
      %52 = vector.broadcast %cst_24 : f32 to vector<8x8xf32>
      %53 = arith.select %40, %5, %52 : vector<8x8xi1>, vector<8x8xf32>
      %cst_25 = arith.constant dense<0.000000e+00> : vector<8xf32>
      %54 = vector.multi_reduction <add>, %53, %cst_25 [1] : vector<8x8xf32> to vector<8xf32>
      %55 = vector.shape_cast %54 : vector<8xf32> to vector<8x1xf32>
      %56 = tpu.iota {dimensions = array<i32: 0>} : vector<8x1xi32>
      %57 = vector.broadcast %16 : i32 to vector<8x1xi32>
      %58 = arith.addi %57, %56 : vector<8x1xi32>
      %59 = vector.broadcast %17 : i32 to vector<8x1xi32>
      %60 = arith.cmpi sge, %58, %59 : vector<8x1xi32>
      %c8_i32_26 = arith.constant 8 : i32
      %61 = arith.addi %17, %c8_i32_26 : i32
      %62 = vector.broadcast %61 : i32 to vector<8x1xi32>
      %63 = arith.cmpi slt, %58, %62 : vector<8x1xi32>
      %64 = arith.andi %60, %63 : vector<8x1xi1>
      %c0_27 = arith.constant 0 : index
      %c0_28 = arith.constant 0 : index
      %65 = vector.load %arg5[%c0_27, %c0_28] : memref<8x1xf32, #tpu.memory_space<vmem>>, vector<8x1xf32>
      %cst_29 = arith.constant 0.000000e+00 : f32
      %66 = vector.broadcast %cst_29 : f32 to vector<8x1xf32>
      %67 = arith.subf %66, %55 : vector<8x1xf32>
      %cst_30 = arith.constant 0.000000e+00 : f32
      %68 = vector.broadcast %cst_30 : f32 to vector<8x1xf32>
      %69 = arith.maximumf %67, %68 : vector<8x1xf32>
      %70 = math.absf %67 : vector<8x1xf32>
      %cst_31 = arith.constant 0.000000e+00 : f32
      %71 = vector.broadcast %cst_31 : f32 to vector<8x1xf32>
      %72 = arith.subf %71, %70 : vector<8x1xf32>
      %73 = math.exp %72 : vector<8x1xf32>
      %74 = math.log1p %73 : vector<8x1xf32>
      %75 = arith.addf %69, %74 : vector<8x1xf32>
      %cst_32 = arith.constant 0.693147182 : f32
      %76 = vector.broadcast %cst_32 : f32 to vector<8x1xf32>
      %77 = arith.subf %76, %75 : vector<8x1xf32>
      %cst_33 = arith.constant 0.000000e+00 : f32
      %78 = vector.broadcast %cst_33 : f32 to vector<8x1xf32>
      %79 = arith.select %64, %77, %78 : vector<8x1xi1>, vector<8x1xf32>
      %80 = arith.addf %65, %79 : vector<8x1xf32>
      %c0_34 = arith.constant 0 : index
      %c0_35 = arith.constant 0 : index
      %81 = vector.load %arg5[%c0_34, %c0_35] : memref<8x1xf32, #tpu.memory_space<vmem>>, vector<8x1xf32>
      tpu.vector_store %arg5[%c0_34, %c0_35], %80 {strides = array<i32>} : memref<8x1xf32, #tpu.memory_space<vmem>>, vector<8x1xf32>,
    } else {
    }
    %c0_i32_14 = arith.constant 0 : i32
    %31 = arith.cmpi eq, %arg1, %c0_i32_14 : i32
    %32 = arith.extui %31 : i1 to i32
    %c0_i32_15 = arith.constant 0 : i32
    %33 = arith.cmpi ne, %32, %c0_i32_15 : i32
    scf.if %33 {
      %c0_16 = arith.constant 0 : index
      %c0_17 = arith.constant 0 : index
      %34 = vector.load %arg4[%c0_16, %c0_17] : memref<8x1xf32, #tpu.memory_space<vmem>>, vector<8x1xf32>
      %cst_18 = arith.constant 0.142857149 : f32
      %35 = vector.broadcast %cst_18 : f32 to vector<8x1xf32>
      %36 = arith.mulf %34, %35 : vector<8x1xf32>
      %c0_19 = arith.constant 0 : index
      %c0_20 = arith.constant 0 : index
      %37 = vector.load %arg5[%c0_19, %c0_20] : memref<8x1xf32, #tpu.memory_space<vmem>>, vector<8x1xf32>
      %38 = arith.subf %36, %37 : vector<8x1xf32>
      %c0_21 = arith.constant 0 : index
      %c0_22 = arith.constant 0 : index
      %39 = vector.load %arg4[%c0_21, %c0_22] : memref<8x1xf32, #tpu.memory_space<vmem>>, vector<8x1xf32>
      tpu.vector_store %arg4[%c0_21, %c0_22], %38 {strides = array<i32>} : memref<8x1xf32, #tpu.memory_space<vmem>>, vector<8x1xf32>,
    } else {
    }
    return
  }
  func.func @transform_0(%arg0: i32, %arg1: i32) -> (i32, i32) {
    %c0_i32 = arith.constant 0 : i32
    %c0_i32_0 = arith.constant 0 : i32
    return %arg0, %c0_i32 : i32, i32
  }
  func.func @transform_1(%arg0: i32, %arg1: i32) -> (i32, i32) {
    %c0_i32 = arith.constant 0 : i32
    %c0_i32_0 = arith.constant 0 : i32
    return %arg1, %c0_i32 : i32, i32
  }
  func.func @transform_2(%arg0: i32, %arg1: i32) -> (i32, i32) {
    %c0_i32 = arith.constant 0 : i32
    %c0_i32_0 = arith.constant 0 : i32
    return %arg0, %c0_i32 : i32, i32
  }
  func.func @transform_3(%arg0: i32, %arg1: i32) -> (i32, i32) {
    %c0_i32 = arith.constant 0 : i32
    %c0_i32_0 = arith.constant 0 : i32
    return %arg0, %c0_i32 : i32, i32
  }
}

</mosaic_0001>

<llo_original>
// kernel: mine_forward.3
$region0: #{mine_forward.3}
  #allocation0 [shape = 'u32[]', space=smem, size = 0x4, offset = 0x4, fixed_abs, tag = 'smem constant byte address 0x4 - core index']
  #allocation1 [shape = 'u32[144,128]{1,0:T(1,128)}', space=vmem, size = 0x12000, scoped, tag = 'internal scratch']
  %s0 = inlined_call_operand.vmem [shape: bf16[8,128], index: 0, kind: input, shape index: {}]
  %s1 = inlined_call_operand.vmem [shape: bf16[8,128], index: 1, kind: input, shape index: {}]
  %s2 = inlined_call_operand.vmem [shape: f32[8,1], index: 2, kind: output, shape index: {0}]
  %s3 = inlined_call_operand.vmem [shape: f32[8,1], index: 3, kind: output, shape index: {1}]
  %4 = xla_tuple %s2, %s3
  %s5 = sld [smem:[#allocation0]]
  $region42: #{mine_forward.3} parent=0
    _
  %s7 = ssub.s32 1, %s5
  %s8 = scalar_select 0, %s7, %s5
  // Predicated region
  $region2: #{mine_forward.3} parent=0 // pred_check
    _
  $region3: #{mine_forward.3} parent=0 // pred_check_branch
    %10 = sbr.rel (0) target = $region5
  $region4: #{mine_forward.3} parent=0 // pred_region
    _
  $region5: #{mine_forward.3} parent=0 // pred_fallthru
    _
  // Predicated region
  $region6: #{mine_forward.3} parent=0 // pred_check
    _
  $region7: #{mine_forward.3} parent=0 // pred_check_branch
    %12 = sbr.rel (0) target = $region9
  $region8: #{mine_forward.3} parent=0 // pred_region
    _
  $region9: #{mine_forward.3} parent=0 // pred_fallthru
    _
  %p14 = scmp.eq.s32.totalorder 0, 0
  // Predicated region
  $region10: #{mine_forward.3} parent=0 // pred_check
    %p15 = pneg %p14
  $region11: #{mine_forward.3} parent=0 // pred_check_branch
    %17 = sbr.rel (%p15) target = $region13
  $region12: #{mine_forward.3} parent=0 // pred_region
    %vm18 = vcmask 7168
    %19 = vst.msk [vmem:[%s2] sm:$0xff] %vm18, 0.0
    %20 = vst.msk [vmem:[%s3] sm:$0xff] %vm18, 0.0
  $region13: #{mine_forward.3} parent=0 // pred_fallthru
    _
  %v21 = vld [vmem:[%s0] sm:$0xf]
  %v22 = vld [vmem:[%s1] sm:$0xf]
  %23 = vmatprep.subr.bf16.mxu0 0
  %24 = vmatpush1.bf16.xpose.msra.mxu0 0
  %25 = vmatprep.subr.bf16.mxu0 0
  %26 = vmatpush1.bf16.xpose.msra.mxu0 0
  %27 = vmatprep.subr.bf16.mxu0 0
  %28 = vmatpush1.bf16.xpose.msra.mxu0 0
  %29 = vmatprep.subr.bf16.mxu0 0
  %30 = vmatpush1.bf16.xpose.msra.mxu0 0
  %31 = vmatprep.subr.bf16.mxu0 0
  %32 = vmatpush1.bf16.xpose.msra.mxu0 0
  %33 = vmatprep.subr.bf16.mxu0 0
  %34 = vmatpush1.bf16.xpose.msra.mxu0 0
  %35 = vmatprep.subr.bf16.mxu0 0
  %36 = vmatpush1.bf16.xpose.msra.mxu0 0
  %37 = vmatprep.subr.bf16.mxu0 0
  %38 = vmatpush1.bf16.xpose.msra.mxu0 %v22
  %39 = vmatprep.subr.bf16.mxu0 0
  %40 = vmatpush2.bf16.xpose.msra.mxu0 0
  %41 = vmatprep.subr.bf16.mxu0 0
  %42 = vmatpush2.bf16.xpose.msra.mxu0 0
  %43 = vmatprep.subr.bf16.mxu0 0
  %44 = vmatpush2.bf16.xpose.msra.mxu0 0
  %45 = vmatprep.subr.bf16.mxu0 0
  %46 = vmatpush2.bf16.xpose.msra.mxu0 0
  %47 = vmatprep.subr.bf16.mxu0 0
  %48 = vmatpush2.bf16.xpose.msra.mxu0 0
  %49 = vmatprep.subr.bf16.mxu0 0
  %50 = vmatpush2.bf16.xpose.msra.mxu0 0
  %51 = vmatprep.subr.bf16.mxu0 0
  %52 = vmatpush2.bf16.xpose.msra.mxu0 0
  %53 = vmatprep.subr.bf16.mxu0 0
  %54 = vmatpush2.bf16.xpose.msra.mxu0 0
  %55 = vmatprep.mubr.bf16.mxu0 0
  %56 = vmatmul.mubr.bf16.gmra.mxu0 %v21
  %v57 = vpop.f32.mrf.mxu0
  %v58 = vadd.f32 0.0, %v57
  %v59 = vpop.f32.mrf.mxu0
  %v60 = vpop.f32.mrf.mxu0
  %v61 = vpop.f32.mrf.mxu0
  %62 = vdwg.mxu0
  %v63 = vmax.f32 %v58, 0.0
  %v64 = vand.u32 2147483647, %v58
  %v65 = vsub.f32 0.0, %v64
  %v66 = vmul.f32 %v65, 1.442695
  %v67 = vpow.pop %v66
  %v68 = vadd.f32 %v67, 1.0
  %v69 = vlog2.pop %v68
  %v70 = vmul.f32 %v69, 0.6931472
  %v71 = vmul.f32 -0.5, %v67
  %v72 = vadd.f32 %v71, 1.0
  %v73 = vmul.f32 %v72, %v67
  %v74 = vand.u32 2147483647, %v67
  %vm75 = vcmp.lt.f32.partialorder %v74, 0.0004427343
  %v76 = vsel %vm75, %v73, %v70
  %v77 = vadd.f32 %v63, %v76
  %v78 = vsub.f32 %v77, 0.6931472
  %s79 = smul.u32 0, 8
  %s80 = smul.u32 0, 8
  %s81 = sadd.s32 %s80, 8
  %p82 = scmp.lt.s32.totalorder %s79, %s81
  %s83 = sadd.s32 %s79, 8
  %p84 = scmp.lt.s32.totalorder %s80, %s83
  %p85 = pnand %p82, %p84
  %p86 = pneg %p85
  %p87 = scmp.gt.s32.totalorder %s81, 8
  %p88 = por %p86, %p87
  // Predicated region
  $region14: #{mine_forward.3} parent=0 // pred_check
    %p89 = pneg %p88
  $region15: #{mine_forward.3} parent=0 // pred_check_branch
    %91 = sbr.rel (%p89) target = $region17
  $region16: #{mine_forward.3} parent=0 // pred_region
    %v92 = vlaneseq
    %v93 = vshrl.u32 %v92, 7
    %v94 = vstv %s79
    %v95 = vadd.s32 %v94, %v93
    %v96 = vlaneseq
    %v97 = vand.u32 %v96, 127
    %v98 = vstv %s80
    %v99 = vadd.s32 %v98, %v97
    %vm100 = vcmp.eq.s32.totalorder %v95, %v99
    %vm101 = vcmp.lt.s32.totalorder %v99, 8
    %vm102 = vmxor %vm100, 1
    %vm103 = vmand %vm101, %vm102
    %v104 = vld [vmem:[%s2] sm:$0xff]
    %v105 = vsel %vm103, %v78, 0.0
    %vm106 = vcmask 64512
    %v107 = vsel %vm106, %v105, 0.0
    %108 = vadd.xlane.f32.xlu0 %v107
    %v109 = vpop.xlane.xlu0 %108
    %v110 = vadd.f32 %v104, %v109
    %vm111 = vcmask 7168
    %112 = vst.msk [vmem:[%s2] sm:$0xff] %vm111, %v110
    %v113 = vsel %vm100, %v58, 0.0
    %v114 = vsel %vm106, %v113, 0.0
    %115 = vadd.xlane.f32.xlu0 %v114
    %v116 = vpop.xlane.xlu0 %115
    %vm117 = vcmp.ge.s32.totalorder %v95, %v98
    %v118 = vstv %s81
    %vm119 = vcmp.lt.s32.totalorder %v95, %v118
    %vm120 = vmand %vm117, %vm119
    %v121 = vld [vmem:[%s3] sm:$0xff]
    %v122 = vsub.f32 0.0, %v116
    %v123 = vmax.f32 %v122, 0.0
    %v124 = vand.u32 2147483647, %v122
    %v125 = vsub.f32 0.0, %v124
    %v126 = vmul.f32 %v125, 1.442695
    %v127 = vpow.pop %v126
    %v128 = vadd.f32 %v127, 1.0
    %v129 = vlog2.pop %v128
    %v130 = vmul.f32 %v129, 0.6931472
    %v131 = vmul.f32 -0.5, %v127
    %v132 = vadd.f32 %v131, 1.0
    %v133 = vmul.f32 %v132, %v127
    %v134 = vand.u32 2147483647, %v127
    %vm135 = vcmp.lt.f32.partialorder %v134, 0.0004427343
    %v136 = vsel %vm135, %v133, %v130
    %v137 = vadd.f32 %v123, %v136
    %v138 = vsub.f32 0.6931472, %v137
    %v139 = vsel %vm120, %v138, 0.0
    %v140 = vadd.f32 %v121, %v139
    %141 = vst.msk [vmem:[%s3] sm:$0xff] %vm111, %v140
  $region17: #{mine_forward.3} parent=0 // pred_fallthru
    _
  %p142 = pneg %p88
  // Predicated region
  $region18: #{mine_forward.3} parent=0 // pred_check
    _
  $region19: #{mine_forward.3} parent=0 // pred_check_branch
    %144 = sbr.rel (%p88) target = $region21
  $region20: #{mine_forward.3} parent=0 // pred_region
    %v145 = vld [vmem:[%s2] sm:$0xff]
    %vm146 = vcmask 64512
    %v147 = vsel %vm146, %v78, 0.0
    %148 = vadd.xlane.f32.xlu0 %v147
    %v149 = vpop.xlane.xlu0 %148
    %v150 = vadd.f32 %v145, %v149
    %vm151 = vcmask 7168
    %152 = vst.msk [vmem:[%s2] sm:$0xff] %vm151, %v150
  $region21: #{mine_forward.3} parent=0 // pred_fallthru
    _
  // Predicated region
  $region22: #{mine_forward.3} parent=0 // pred_check
    %p153 = pneg %p14
  $region23: #{mine_forward.3} parent=0 // pred_check_branch
    %155 = sbr.rel (%p153) target = $region25
  $region24: #{mine_forward.3} parent=0 // pred_region
    %v156 = vld [vmem:[%s2] sm:$0xff]
    %v157 = vmul.f32 %v156, 0.14285715
    %v158 = vld [vmem:[%s3] sm:$0xff]
    %v159 = vsub.f32 %v157, %v158
    %vm160 = vcmask 7168
    %161 = vst.msk [vmem:[%s2] sm:$0xff] %vm160, %v159
  $region25: #{mine_forward.3} parent=0 // pred_fallthru
    _
  // Predicated region
  $region26: #{mine_forward.3} parent=0 // pred_check
    _
  $region27: #{mine_forward.3} parent=0 // pred_check_branch
    %163 = sbr.rel (0) target = $region29
  $region28: #{mine_forward.3} parent=0 // pred_region
    _
  $region29: #{mine_forward.3} parent=0 // pred_fallthru
    _
  // Predicated region
  $region30: #{mine_forward.3} parent=0 // pred_check
    _
  $region31: #{mine_forward.3} parent=0 // pred_check_branch
    %165 = sbr.rel (0) target = $region33
  $region32: #{mine_forward.3} parent=0 // pred_region
    _
  $region33: #{mine_forward.3} parent=0 // pred_fallthru
    _
  // Predicated region
  $region34: #{mine_forward.3} parent=0 // pred_check
    _
  $region35: #{mine_forward.3} parent=0 // pred_check_branch
    %167 = sbr.rel (0) target = $region37
  $region36: #{mine_forward.3} parent=0 // pred_region
    _
  $region37: #{mine_forward.3} parent=0 // pred_fallthru
    _
  // Predicated region
  $region38: #{mine_forward.3} parent=0 // pred_check
    _
  $region39: #{mine_forward.3} parent=0 // pred_check_branch
    %169 = sbr.rel (0) target = $region41
  $region40: #{mine_forward.3} parent=0 // pred_region
    _
  $region41: #{mine_forward.3} parent=0 // pred_fallthru
    _

// kernel: mine_forward.2
$region0: #{mine_forward.2}
  #allocation0 [shape = 'u32[]', space=smem, size = 0x4, offset = 0x4, fixed_abs, tag = 'smem constant byte address 0x4 - core index']
  #allocation1 [shape = 'u32[144,128]{1,0:T(1,128)}', space=vmem, size = 0x12000, scoped, tag = 'internal scratch']
  %s0 = inlined_call_operand.vmem [shape: bf16[8,80], index: 0, kind: input, shape index: {}]
  %s1 = inlined_call_operand.hbm [shape: bf16[80,256], index: 1, kind: input, shape index: {}]
  %s2 = inlined_call_operand.vmem [shape: f32[1,256], index: 2, kind: input, shape index: {}]
  %s3 = inlined_call_operand.hbm [shape: bf16[128,128], index: 3, kind: input, shape index: {}]
  %s4 = inlined_call_operand.vmem [shape: f32[1,128], index: 4, kind: input, shape index: {}]
  %s5 = inlined_call_operand.vmem [shape: bf16[8,128], index: 5, kind: output, shape index: {0}]
  %s6 = inlined_call_operand.vmem [shape: bf16[8,128], index: 6, kind: output, shape index: {1}]
  %7 = xla_tuple %s5, %s6
  %s8 = sld [smem:[#allocation0]]
  $region46: #{mine_forward.2} parent=0
    _
  %s10 = ssub.s32 1, %s8
  %s11 = scalar_select 0, %s10, %s8
  $region1: #{mine_forward.2} parent=0
    #allocation2 [shape = 'u8[40960]{0}', space=vmem, size = 0xa000, scoped, tag = 'input window, operand 1, single buffered']
    #allocation3 [shape = 's32[1]{0}', space=sflag, size = 0x4, scoped, tag = 'scoped memory for mine_forward.2']
    #allocation4 [shape = 'u8[32768]{0}', space=vmem, size = 0x8000, scoped, tag = 'input window, operand 3, single buffered']
    #allocation5 [shape = 's32[1]{0}', space=sflag, size = 0x4, scoped, tag = 'scoped memory for mine_forward.2']
    %12 = vsyncpa [#allocation3], 0
    %13 = vsyncpa [#allocation5], 0
    // Predicated region
    $region2: #{mine_forward.2} parent=1 // pred_check
      _
    $region3: #{mine_forward.2} parent=1 // pred_check_branch
      %15 = sbr.rel (0) target = $region5
    $region4: #{mine_forward.2} parent=1 // pred_region
      _
    $region5: #{mine_forward.2} parent=1 // pred_fallthru
      _
    // Predicated region
    $region6: #{mine_forward.2} parent=1 // pred_check
      _
    $region7: #{mine_forward.2} parent=1 // pred_check_branch
      %17 = sbr.rel (0) target = $region9
    $region8: #{mine_forward.2} parent=1 // pred_region
      %s19 = ssub.s32 1280, 1280
      %20 = vsyncadd [#allocation3], %s19
      %s21 = sshll.u32 [#allocation2], 4
      %s22 = int_to_ptr.vmem [resolvable:$true] %s21
      %27 = dma.hbm_to_vmem [thread:$0]  %s1, 1280, %s22, [#allocation3], 128, 128, 8
    $region9: #{mine_forward.2} parent=1 // pred_fallthru
      _
    // Predicated region
    $region10: #{mine_forward.2} parent=1 // pred_check
      _
    $region11: #{mine_forward.2} parent=1 // pred_check_branch
      %29 = sbr.rel (0) target = $region13
    $region12: #{mine_forward.2} parent=1 // pred_region
      _
    $region13: #{mine_forward.2} parent=1 // pred_fallthru
      _
    // Predicated region
    $region14: #{mine_forward.2} parent=1 // pred_check
      _
    $region15: #{mine_forward.2} parent=1 // pred_check_branch
      %31 = sbr.rel (0) target = $region17
    $region16: #{mine_forward.2} parent=1 // pred_region
      %s33 = ssub.s32 1024, 1024
      %34 = vsyncadd [#allocation5], %s33
      %s35 = sshll.u32 [#allocation4], 4
      %s36 = int_to_ptr.vmem [resolvable:$true] %s35
      %41 = dma.hbm_to_vmem [thread:$0]  %s3, 1024, %s36, [#allocation5], 64, 64, 4
    $region17: #{mine_forward.2} parent=1 // pred_fallthru
      _
    // Predicated region
    $region18: #{mine_forward.2} parent=1 // pred_check
      _
    $region19: #{mine_forward.2} parent=1 // pred_check_branch
      %43 = sbr.rel (0) target = $region21
    $region20: #{mine_forward.2} parent=1 // pred_region
      _
    $region21: #{mine_forward.2} parent=1 // pred_fallthru
      _
    // Predicated region
    $region22: #{mine_forward.2} parent=1 // pred_check
      _
    $region23: #{mine_forward.2} parent=1 // pred_check_branch
      %45 = sbr.rel (0) target = $region25
    $region24: #{mine_forward.2} parent=1 // pred_region
      %46 = dma.done [#allocation3], 1280
    $region25: #{mine_forward.2} parent=1 // pred_fallthru
      _
    // Predicated region
    $region26: #{mine_forward.2} parent=1 // pred_check
      _
    $region27: #{mine_forward.2} parent=1 // pred_check_branch
      %48 = sbr.rel (0) target = $region29
    $region28: #{mine_forward.2} parent=1 // pred_region
      %49 = dma.done [#allocation5], 1024
    $region29: #{mine_forward.2} parent=1 // pred_fallthru
      _
    %v51 = vld [vmem:[%s0] sm:$0xf]
    %v52 = vld [vmem:[#allocation2] sm:$0xff]
    %v53 = vld [vmem:[#allocation2 + $0x8] sm:$0xff]
    %v54 = vld [vmem:[#allocation2 + $0x10] sm:$0xff]
    %v55 = vld [vmem:[#allocation2 + $0x18] sm:$0xff]
    %v56 = vld [vmem:[#allocation2 + $0x20] sm:$0xff]
    %v57 = vld [vmem:[#allocation2 + $0x28] sm:$0xff]
    %v58 = vld [vmem:[#allocation2 + $0x30] sm:$0xff]
    %v59 = vld [vmem:[#allocation2 + $0x38] sm:$0xff]
    %v60 = vld [vmem:[#allocation2 + $0x40] sm:$0xff]
    %v61 = vld [vmem:[#allocation2 + $0x48] sm:$0xff]
    %v62 = vld [vmem:[%s2] sm:$0x3]
    %v64 = vlaneseq
    %v65 = vshrl.u32 %v64, 7
    %v66 = vsub.s32 0, %v65
    %v67 = vrot.slane %v62, %v66
    %v68 = vlaneseq
    %v69 = vshrl.u32 %v68, 7
    %v70 = vsub.s32 1, %v69
    %v71 = vrot.slane %v62, %v70
    %v84 = vunpack.c.l.b16 %v52
    %v85 = vunpack.c.h.b16 %v52
    %v86 = vunpack.c.l.b16 %v53
    %v87 = vunpack.c.h.b16 %v53
    %v88 = vunpack.c.l.b16 %v54
    %v89 = vunpack.c.h.b16 %v54
    %v90 = vunpack.c.l.b16 %v55
    %v91 = vunpack.c.h.b16 %v55
    %v92 = vunpack.c.l.b16 %v56
    %v93 = vunpack.c.h.b16 %v56
    %v94 = vunpack.c.l.b16 %v57
    %v95 = vunpack.c.h.b16 %v57
    %v96 = vunpack.c.l.b16 %v58
    %v97 = vunpack.c.h.b16 %v58
    %v98 = vunpack.c.l.b16 %v59
    %v99 = vunpack.c.h.b16 %v59
    %v100 = vunpack.c.l.b16 %v60
    %v101 = vunpack.c.h.b16 %v60
    %v102 = vunpack.c.l.b16 %v61
    %v103 = vunpack.c.h.b16 %v61
    %v104 = vpack.c.b16 %v86, %v84
    %v105 = vpack.c.b16 %v87, %v85
    %v106 = vpack.c.b16 %v90, %v88
    %v107 = vpack.c.b16 %v91, %v89
    %v108 = vpack.c.b16 %v94, %v92
    %v109 = vpack.c.b16 %v95, %v93
    %v110 = vpack.c.b16 %v98, %v96
    %v111 = vpack.c.b16 %v99, %v97
    %v112 = vpack.c.b16 %v102, %v100
    %v113 = vpack.c.b16 %v103, %v101
    %vm124 = vcmask 654336
    %v126 = vsel %vm124, %v51, 0
    %128 = vmatprep.subr.bf16.mxu0 0
    %129 = vmatpush1.bf16.msra.mxu0 0
    %130 = vmatprep.subr.bf16.mxu0 0
    %131 = vmatpush1.bf16.msra.mxu0 0
    %132 = vmatprep.subr.bf16.mxu0 0
    %133 = vmatpush1.bf16.msra.mxu0 0
    %134 = vmatprep.subr.bf16.mxu0 %v113
    %135 = vmatpush1.bf16.msra.mxu0 %v112
    %136 = vmatprep.subr.bf16.mxu0 %v111
    %137 = vmatpush1.bf16.msra.mxu0 %v110
    %138 = vmatprep.subr.bf16.mxu0 %v109
    %139 = vmatpush1.bf16.msra.mxu0 %v108
    %140 = vmatprep.subr.bf16.mxu0 %v107
    %141 = vmatpush1.bf16.msra.mxu0 %v106
    %142 = vmatprep.subr.bf16.mxu0 %v105
    %143 = vmatpush1.bf16.msra.mxu0 %v104
    %144 = vmatprep.subr.bf16.mxu0 0
    %145 = vmatpush2.bf16.msra.mxu0 0
    %146 = vmatprep.subr.bf16.mxu0 0
    %147 = vmatpush2.bf16.msra.mxu0 0
    %148 = vmatprep.subr.bf16.mxu0 0
    %149 = vmatpush2.bf16.msra.mxu0 0
    %150 = vmatprep.subr.bf16.mxu0 0
    %151 = vmatpush2.bf16.msra.mxu0 0
    %152 = vmatprep.subr.bf16.mxu0 0
    %153 = vmatpush2.bf16.msra.mxu0 0
    %154 = vmatprep.subr.bf16.mxu0 0
    %155 = vmatpush2.bf16.msra.mxu0 0
    %156 = vmatprep.subr.bf16.mxu0 0
    %157 = vmatpush2.bf16.msra.mxu0 0
    %158 = vmatprep.subr.bf16.mxu0 0
    %159 = vmatpush2.bf16.msra.mxu0 0
    %160 = vmatprep.mubr.bf16.mxu0 0
    %161 = vmatmul.mubr.bf16.gmra.mxu0 %v126
    %v162 = vpop.f32.mrf.mxu0
    %v163 = vadd.f32 %v67, %v162
    %v164 = vpop.f32.mrf.mxu0
    %v165 = vadd.f32 %v71, %v164
    %v166 = vpop.f32.mrf.mxu0
    %v167 = vpop.f32.mrf.mxu0
    %168 = vdwg.mxu0
    %vm169 = vcmp.gt.f32.partialorder %v163, 0.0
    %vm170 = vcmp.gt.f32.partialorder %v165, 0.0
    %v171 = vmul.f32 %v163, 0.01
    %v172 = vmul.f32 %v165, 0.01
    %v173 = vsel %vm169, %v163, %v171
    %v174 = vsel %vm170, %v165, %v172
    %v175 = vpack.c.bf16 %v174, %v174
    %176 = vst [vmem:[%s6] sm:$0xf] %v175
    %v177 = vpack.c.bf16 %v173, %v173
    %v178 = vld [vmem:[#allocation4] sm:$0xf]
    %v179 = vld [vmem:[#allocation4 + $0x4] sm:$0xf]
    %v180 = vld [vmem:[#allocation4 + $0x8] sm:$0xf]
    %v181 = vld [vmem:[#allocation4 + $0xc] sm:$0xf]
    %v182 = vld [vmem:[#allocation4 + $0x10] sm:$0xf]
    %v183 = vld [vmem:[#allocation4 + $0x14] sm:$0xf]
    %v184 = vld [vmem:[#allocation4 + $0x18] sm:$0xf]
    %v185 = vld [vmem:[#allocation4 + $0x1c] sm:$0xf]
    %v186 = vld [vmem:[#allocation4 + $0x20] sm:$0xf]
    %v187 = vld [vmem:[#allocation4 + $0x24] sm:$0xf]
    %v188 = vld [vmem:[#allocation4 + $0x28] sm:$0xf]
    %v189 = vld [vmem:[#allocation4 + $0x2c] sm:$0xf]
    %v190 = vld [vmem:[#allocation4 + $0x30] sm:$0xf]
    %v191 = vld [vmem:[#allocation4 + $0x34] sm:$0xf]
    %v192 = vld [vmem:[#allocation4 + $0x38] sm:$0xf]
    %v193 = vld [vmem:[#allocation4 + $0x3c] sm:$0xf]
    %v194 = vld [vmem:[%s4] sm:$0x1]
    %v196 = vlaneseq
    %v197 = vshrl.u32 %v196, 7
    %v198 = vsub.s32 0, %v197
    %v199 = vrot.slane %v194, %v198
    %v217 = vunpack.c.l.b16 %v178
    %v218 = vunpack.c.l.b16 %v179
    %v219 = vunpack.c.l.b16 %v180
    %v220 = vunpack.c.l.b16 %v181
    %v221 = vunpack.c.l.b16 %v182
    %v222 = vunpack.c.l.b16 %v183
    %v223 = vunpack.c.l.b16 %v184
    %v224 = vunpack.c.l.b16 %v185
    %v225 = vunpack.c.l.b16 %v186
    %v226 = vunpack.c.l.b16 %v187
    %v227 = vunpack.c.l.b16 %v188
    %v228 = vunpack.c.l.b16 %v189
    %v229 = vunpack.c.l.b16 %v190
    %v230 = vunpack.c.l.b16 %v191
    %v231 = vunpack.c.l.b16 %v192
    %v232 = vunpack.c.l.b16 %v193
    %v233 = vpack.c.b16 %v218, %v217
    %v234 = vpack.c.b16 %v220, %v219
    %v235 = vpack.c.b16 %v222, %v221
    %v236 = vpack.c.b16 %v224, %v223
    %v237 = vpack.c.b16 %v226, %v225
    %v238 = vpack.c.b16 %v228, %v227
    %v239 = vpack.c.b16 %v230, %v229
    %v240 = vpack.c.b16 %v232, %v231
    %249 = vmatprep.subr.bf16.mxu0 0
    %250 = vmatpush1.bf16.msra.mxu0 %v240
    %251 = vmatprep.subr.bf16.mxu0 0
    %252 = vmatpush1.bf16.msra.mxu0 %v239
    %253 = vmatprep.subr.bf16.mxu0 0
    %254 = vmatpush1.bf16.msra.mxu0 %v238
    %255 = vmatprep.subr.bf16.mxu0 0
    %256 = vmatpush1.bf16.msra.mxu0 %v237
    %257 = vmatprep.subr.bf16.mxu0 0
    %258 = vmatpush1.bf16.msra.mxu0 %v236
    %259 = vmatprep.subr.bf16.mxu0 0
    %260 = vmatpush1.bf16.msra.mxu0 %v235
    %261 = vmatprep.subr.bf16.mxu0 0
    %262 = vmatpush1.bf16.msra.mxu0 %v234
    %263 = vmatprep.subr.bf16.mxu0 0
    %264 = vmatpush1.bf16.msra.mxu0 %v233
    %265 = vmatprep.subr.bf16.mxu0 0
    %266 = vmatpush2.bf16.msra.mxu0 0
    %267 = vmatprep.subr.bf16.mxu0 0
    %268 = vmatpush2.bf16.msra.mxu0 0
    %269 = vmatprep.subr.bf16.mxu0 0
    %270 = vmatpush2.bf16.msra.mxu0 0
    %271 = vmatprep.subr.bf16.mxu0 0
    %272 = vmatpush2.bf16.msra.mxu0 0
    %273 = vmatprep.subr.bf16.mxu0 0
    %274 = vmatpush2.bf16.msra.mxu0 0
    %275 = vmatprep.subr.bf16.mxu0 0
    %276 = vmatpush2.bf16.msra.mxu0 0
    %277 = vmatprep.subr.bf16.mxu0 0
    %278 = vmatpush2.bf16.msra.mxu0 0
    %279 = vmatprep.subr.bf16.mxu0 0
    %280 = vmatpush2.bf16.msra.mxu0 0
    %281 = vmatprep.mubr.bf16.mxu0 0
    %282 = vmatmul.mubr.bf16.gmra.mxu0 %v177
    %v283 = vpop.f32.mrf.mxu0
    %v284 = vadd.f32 %v199, %v283
    %v285 = vpop.f32.mrf.mxu0
    %v286 = vpop.f32.mrf.mxu0
    %v287 = vpop.f32.mrf.mxu0
    %288 = vdwg.mxu0
    %vm289 = vcmp.gt.f32.partialorder %v284, 0.0
    %v290 = vmul.f32 %v284, 0.01
    %v291 = vsel %vm289, %v284, %v290
    %v292 = vpack.c.bf16 %v291, %v291
    %293 = vst [vmem:[%s5] sm:$0xf] %v292
    // Predicated region
    $region30: #{mine_forward.2} parent=1 // pred_check
      _
    $region31: #{mine_forward.2} parent=1 // pred_check_branch
      %295 = sbr.rel (0) target = $region33
    $region32: #{mine_forward.2} parent=1 // pred_region
      _
    $region33: #{mine_forward.2} parent=1 // pred_fallthru
      _
    // Predicated region
    $region34: #{mine_forward.2} parent=1 // pred_check
      _
    $region35: #{mine_forward.2} parent=1 // pred_check_branch
      %297 = sbr.rel (0) target = $region37
    $region36: #{mine_forward.2} parent=1 // pred_region
      _
    $region37: #{mine_forward.2} parent=1 // pred_fallthru
      _
    // Predicated region
    $region38: #{mine_forward.2} parent=1 // pred_check
      _
    $region39: #{mine_forward.2} parent=1 // pred_check_branch
      %299 = sbr.rel (0) target = $region41
    $region40: #{mine_forward.2} parent=1 // pred_region
      _
    $region41: #{mine_forward.2} parent=1 // pred_fallthru
      _
    // Predicated region
    $region42: #{mine_forward.2} parent=1 // pred_check
      _
    $region43: #{mine_forward.2} parent=1 // pred_check_branch
      %301 = sbr.rel (0) target = $region45
    $region44: #{mine_forward.2} parent=1 // pred_region
      _
    $region45: #{mine_forward.2} parent=1 // pred_fallthru
      _
    %302 = vsyncpa [#allocation3], 1
    %303 = vsyncpa [#allocation5], 1

</llo_original>
